<compile_context>
chip_gen: v7x
topology: tpu7x:2x2x1
jax: 0.10.0
libtpu: 0.0.40
codegen_flags: <defaults>
</compile_context>

<pallas_src>
import functools
import math

import jax
import jax.numpy as jnp
from jax.experimental import pallas as pl
from jax.experimental.pallas import tpu as pltpu


# --------------------------- helpers ---------------------------

def _fit(n, target):
    """Largest divisor of n that is <= target (full dim at toy sizes)."""
    t = min(n, target)
    while t > 1 and n % t != 0:
        t -= 1
    return max(t, 1)


# --------------------------- Pallas kernels ---------------------------

def _linear_kernel(x_ref, w_ref, b_ref, o_ref, acc_ref, *, activation):
    k = pl.program_id(2)

    @pl.when(k == 0)
    def _():
        acc_ref[...] = jnp.zeros_like(acc_ref)

    acc_ref[...] += jnp.dot(x_ref[...].astype(jnp.bfloat16),
                            w_ref[...].astype(jnp.bfloat16),
                            preferred_element_type=jnp.float32)

    @pl.when(k == pl.num_programs(2) - 1)
    def _():
        y = acc_ref[...] + b_ref[...]
        if activation == "relu":
            y = jnp.maximum(y, 0.0)
        o_ref[...] = y.astype(o_ref.dtype)


def linear(x2d, w, b, activation=None):
    M, K = x2d.shape
    N = w.shape[1]
    tm = _fit(M, 256)
    tn = _fit(N, 256)
    tk = _fit(K, 512)
    return pl.pallas_call(
        functools.partial(_linear_kernel, activation=activation),
        out_shape=jax.ShapeDtypeStruct((M, N), jnp.float32),
        grid=(M // tm, N // tn, K // tk),
        in_specs=[
            pl.BlockSpec((tm, tk), lambda i, j, k: (i, k)),
            pl.BlockSpec((tk, tn), lambda i, j, k: (k, j)),
            pl.BlockSpec((1, tn), lambda i, j, k: (0, j)),
        ],
        out_specs=pl.BlockSpec((tm, tn), lambda i, j, k: (i, j)),
        scratch_shapes=[pltpu.VMEM((tm, tn), jnp.float32)],
        compiler_params=pltpu.CompilerParams(
            dimension_semantics=("parallel", "parallel", "arbitrary")),
    )(x2d, w, b.reshape(1, N))


def _linear_res_ln_kernel(x_ref, w_ref, b_ref, r_ref, g_ref, bt_ref,
                          o_ref, acc_ref, *, eps):
    k = pl.program_id(1)

    @pl.when(k == 0)
    def _():
        acc_ref[...] = jnp.zeros_like(acc_ref)

    acc_ref[...] += jnp.dot(x_ref[...].astype(jnp.bfloat16),
                            w_ref[...].astype(jnp.bfloat16),
                            preferred_element_type=jnp.float32)

    @pl.when(k == pl.num_programs(1) - 1)
    def _():
        y = acc_ref[...] + b_ref[...] + r_ref[...]
        mu = jnp.mean(y, axis=-1, keepdims=True)
        var = jnp.mean((y - mu) * (y - mu), axis=-1, keepdims=True)
        o_ref[...] = ((y - mu) * jax.lax.rsqrt(var + eps) * g_ref[...]
                      + bt_ref[...]).astype(o_ref.dtype)


def linear_res_ln(x2d, w, b, res2d, gamma, beta, eps=1e-12):
    """out = LayerNorm(x2d @ w + b + res2d); LN over the full N dim."""
    M, K = x2d.shape
    N = w.shape[1]
    tm = _fit(M, 256)
    tk = _fit(K, 512)
    return pl.pallas_call(
        functools.partial(_linear_res_ln_kernel, eps=eps),
        out_shape=jax.ShapeDtypeStruct((M, N), jnp.float32),
        grid=(M // tm, K // tk),
        in_specs=[
            pl.BlockSpec((tm, tk), lambda i, k: (i, k)),
            pl.BlockSpec((tk, N), lambda i, k: (k, 0)),
            pl.BlockSpec((1, N), lambda i, k: (0, 0)),
            pl.BlockSpec((tm, N), lambda i, k: (i, 0)),
            pl.BlockSpec((1, N), lambda i, k: (0, 0)),
            pl.BlockSpec((1, N), lambda i, k: (0, 0)),
        ],
        out_specs=pl.BlockSpec((tm, N), lambda i, k: (i, 0)),
        scratch_shapes=[pltpu.VMEM((tm, N), jnp.float32)],
        compiler_params=pltpu.CompilerParams(
            dimension_semantics=("parallel", "arbitrary")),
    )(x2d, w, b.reshape(1, N), res2d, gamma.reshape(1, N), beta.reshape(1, N))


def _mha_kernel(q_ref, k_ref, v_ref, qp_ref, kp_ref, o_ref, *,
                n_head, scale, causal):
    # q: (Sq, D), k/v: (Sk, D), qp: (Sq, 1), kp: (1, Sk); D = n_head * Dh
    q = q_ref[...]
    k = k_ref[...]
    v = v_ref[...]
    Sq, D = q.shape
    Sk = k.shape[0]
    Dh = D // n_head

    # Build padding (+ optional causal) mask in-kernel from O(S) pad vectors.
    pad = (qp_ref[...] != 0) | (kp_ref[...] != 0)          # (Sq, Sk)
    if causal:
        row = jax.lax.broadcasted_iota(jnp.int32, (Sq, Sk), 0)
        col = jax.lax.broadcasted_iota(jnp.int32, (Sq, Sk), 1)
        pad = pad | (col > row)

    qb = (q * scale).astype(jnp.bfloat16)                   # fold 1/sqrt(Dh) into q
    kb = k.astype(jnp.bfloat16)
    vb = v.astype(jnp.bfloat16)

    # TODO(synk): for long sequences, flash-style tiling over the KV axis with
    # online-softmax scratch instead of the full (Sq, Sk) score matrix.
    ctx = []
    for h in range(n_head):
        sl = slice(h * Dh, (h + 1) * Dh)
        s = jax.lax.dot_general(
            qb[:, sl], kb[:, sl],
            dimension_numbers=(((1,), (1,)), ((), ())),      # contract Dh, no k.T
            preferred_element_type=jnp.float32)              # (Sq, Sk)
        s = jnp.where(pad, -1e9, s)
        s = s - jnp.max(s, axis=-1, keepdims=True)
        p = jnp.exp(s)
        p = p * pl.reciprocal(jnp.sum(p, axis=-1, keepdims=True), approx=True)
        ctx.append(jnp.dot(p.astype(jnp.bfloat16), vb[:, sl],
                           preferred_element_type=jnp.float32))

    # One lane-dense (Sq, D) store instead of per-head lane-sparse stores.
    o_ref[...] = jnp.concatenate(ctx, axis=-1).astype(o_ref.dtype)


def attention_context(q3, k3, v3, q_pad, k_pad, causal, n_head):
    """q3: (B,Sq,D), k3/v3: (B,Sk,D), q_pad: (B,Sq,1), k_pad: (B,1,Sk)."""
    B, Sq, D = q3.shape
    Sk = k3.shape[1]
    scale = 1.0 / math.sqrt(D // n_head)
    return pl.pallas_call(
        functools.partial(_mha_kernel, n_head=n_head, scale=scale,
                          causal=causal),
        out_shape=jax.ShapeDtypeStruct((B, Sq, D), jnp.float32),
        grid=(B,),
        in_specs=[
            pl.BlockSpec((None, Sq, D), lambda b: (b, 0, 0)),
            pl.BlockSpec((None, Sk, D), lambda b: (b, 0, 0)),
            pl.BlockSpec((None, Sk, D), lambda b: (b, 0, 0)),
            pl.BlockSpec((None, Sq, 1), lambda b: (b, 0, 0)),
            pl.BlockSpec((None, 1, Sk), lambda b: (b, 0, 0)),
        ],
        out_specs=pl.BlockSpec((None, Sq, D), lambda b: (b, 0, 0)),
        compiler_params=pltpu.CompilerParams(
            dimension_semantics=("parallel",)),
    )(q3, k3, v3, q_pad, k_pad)


def _softmax_kernel(x_ref, o_ref):
    x = x_ref[...]
    x = x - jnp.max(x, axis=-1, keepdims=True)
    e = jnp.exp(x)
    o_ref[...] = e / jnp.sum(e, axis=-1, keepdims=True)


def softmax_lastdim(x2d):
    M, N = x2d.shape
    tm = _fit(M, 256)
    return pl.pallas_call(
        _softmax_kernel,
        out_shape=jax.ShapeDtypeStruct((M, N), jnp.float32),
        grid=(M // tm,),
        in_specs=[pl.BlockSpec((tm, N), lambda i: (i, 0))],
        out_specs=pl.BlockSpec((tm, N), lambda i: (i, 0)),
        compiler_params=pltpu.CompilerParams(
            dimension_semantics=("parallel",)),
    )(x2d)


# --------------------------- plain-JAX glue ---------------------------

def sinusoidal_pe(seq_len, d_model):
    pos = jnp.arange(seq_len, dtype=jnp.float32)[:, None]
    i = jnp.arange(0, d_model, 2, dtype=jnp.float32)
    angle = pos / jnp.power(10000.0, i / d_model)
    pe = jnp.zeros((seq_len, d_model), jnp.float32)
    pe = pe.at[:, 0::2].set(jnp.sin(angle))
    pe = pe.at[:, 1::2].set(jnp.cos(angle))
    return pe


def self_attention(x, q_pad, k_pad, causal, p, n_head):
    B, S, D = x.shape
    qkv = linear(x.reshape(B * S, D), p["w_qkv"], p["b_qkv"])   # fused QKV
    qkv = qkv.reshape(B, S, 3 * D)
    q = qkv[:, :, 0 * D:1 * D]
    k = qkv[:, :, 1 * D:2 * D]
    v = qkv[:, :, 2 * D:3 * D]
    return attention_context(q, k, v, q_pad, k_pad, causal, n_head)


def cross_attention(x_dec, enc, q_pad, k_pad, p, n_head):
    B, Sq, D = x_dec.shape
    Sk = enc.shape[1]
    q = linear(x_dec.reshape(B * Sq, D),
               p["w_qkv"][:, :D], p["b_qkv"][:D]).reshape(B, Sq, D)
    kv = linear(enc.reshape(B * Sk, D),
                p["w_qkv"][:, D:], p["b_qkv"][D:]).reshape(B, Sk, 2 * D)
    k = kv[:, :, :D]
    v = kv[:, :, D:]
    return attention_context(q, k, v, q_pad, k_pad, False, n_head)


def encoder_layer(x, pad_q, pad_k, lp, n_head):
    B, S, D = x.shape
    x2d = x.reshape(B * S, D)
    ctx = self_attention(x, pad_q, pad_k, False, lp["attn"], n_head)
    # fused wo projection + residual + LayerNorm
    x2d = linear_res_ln(ctx.reshape(B * S, D), lp["attn"]["wo"]["w"],
                        lp["attn"]["wo"]["b"], x2d,
                        lp["ln1"]["g"], lp["ln1"]["b"])
    h = linear(x2d, lp["ffn"]["l1"]["w"], lp["ffn"]["l1"]["b"],
               activation="relu")
    # fused l2 projection + residual + LayerNorm
    x2d = linear_res_ln(h, lp["ffn"]["l2"]["w"], lp["ffn"]["l2"]["b"], x2d,
                        lp["ln2"]["g"], lp["ln2"]["b"])
    return x2d.reshape(B, S, D)


def decoder_layer(x, enc, dec_pad_q, dec_pad_k, enc_pad_q, enc_pad_k,
                  lp, n_head):
    B, S, D = x.shape
    x2d = x.reshape(B * S, D)
    ctx = self_attention(x, dec_pad_q, dec_pad_k, True, lp["self_attn"], n_head)
    x2d = linear_res_ln(ctx.reshape(B * S, D), lp["self_attn"]["wo"]["w"],
                        lp["self_attn"]["wo"]["b"], x2d,
                        lp["ln1"]["g"], lp["ln1"]["b"])
    x = x2d.reshape(B, S, D)
    # NOTE: cross-attention uses encMask = genPaddingMask(xEnc, xEnc) to match
    # the reference module exactly (its documented behavior).
    ctx = cross_attention(x, enc, enc_pad_q, enc_pad_k, lp["cross_attn"], n_head)
    x2d = linear_res_ln(ctx.reshape(B * S, D), lp["cross_attn"]["wo"]["w"],
                        lp["cross_attn"]["wo"]["b"], x2d,
                        lp["ln2"]["g"], lp["ln2"]["b"])
    h = linear(x2d, lp["ffn"]["l1"]["w"], lp["ffn"]["l1"]["b"],
               activation="relu")
    x2d = linear_res_ln(h, lp["ffn"]["l2"]["w"], lp["ffn"]["l2"]["b"], x2d,
                        lp["ln3"]["g"], lp["ln3"]["b"])
    return x2d.reshape(B, S, D)


def transformer_forward(params, x_enc, x_dec, pad_idx):
    B, S = x_enc.shape
    n_head = params["n_head"]

    # O(S) pad vectors; full masks are rebuilt inside the attention kernel.
    enc_pad = (x_enc == pad_idx).astype(jnp.int32)
    dec_pad = (x_dec == pad_idx).astype(jnp.int32)
    enc_pad_q = enc_pad[:, :, None]   # (B, S, 1) query-side
    enc_pad_k = enc_pad[:, None, :]   # (B, 1, S) key-side
    dec_pad_q = dec_pad[:, :, None]
    dec_pad_k = dec_pad[:, None, :]

    # Embedding lookup + sinusoidal PE; dropout is identity (eval / p=0).
    # TODO(synk): embedding gather stays in plain JAX (data-dependent gather).
    h_enc = params["emb_enc"][x_enc] + params["pe"][None, :S, :]
    for lp in params["enc_layers"]:
        h_enc = encoder_layer(h_enc, enc_pad_q, enc_pad_k, lp, n_head)

    h_dec = params["emb_dec"][x_dec] + params["pe"][None, :S, :]
    for lp in params["dec_layers"]:
        h_dec = decoder_layer(h_dec, h_enc, dec_pad_q, dec_pad_k,
                              enc_pad_q, enc_pad_k, lp, n_head)

    D = h_dec.shape[-1]
    logits = linear(h_dec.reshape(B * S, D),
                    params["out_proj"]["w"], params["out_proj"]["b"])
    out = softmax_lastdim(logits)
    return out.reshape(B, S, -1)


# --------------------------- parameter init ---------------------------

def init_linear(key, n_in, n_out):
    return {"w": jax.random.normal(key, (n_in, n_out), jnp.float32) * 0.02,
            "b": jnp.zeros((n_out,), jnp.float32)}


def init_mha(key, d_model):
    k = jax.random.split(key, 4)
    wq = jax.random.normal(k[0], (d_model, d_model), jnp.float32) * 0.02
    wk = jax.random.normal(k[1], (d_model, d_model), jnp.float32) * 0.02
    wv = jax.random.normal(k[2], (d_model, d_model), jnp.float32) * 0.02
    return {"w_qkv": jnp.concatenate([wq, wk, wv], axis=1),   # fused (D, 3D)
            "b_qkv": jnp.zeros((3 * d_model,), jnp.float32),
            "wo": init_linear(k[3], d_model, d_model)}


def init_ln(d_model):
    return {"g": jnp.ones((d_model,), jnp.float32),
            "b": jnp.zeros((d_model,), jnp.float32)}


def init_ffn(key, d_model, hidden):
    k = jax.random.split(key, 2)
    return {"l1": init_linear(k[0], d_model, hidden),
            "l2": init_linear(k[1], hidden, d_model)}


def init_encoder_layer(key, d_model, hidden):
    k = jax.random.split(key, 2)
    return {"attn": init_mha(k[0], d_model), "ln1": init_ln(d_model),
            "ffn": init_ffn(k[1], d_model, hidden), "ln2": init_ln(d_model)}


def init_decoder_layer(key, d_model, hidden):
    k = jax.random.split(key, 3)
    return {"self_attn": init_mha(k[0], d_model), "ln1": init_ln(d_model),
            "cross_attn": init_mha(k[1], d_model), "ln2": init_ln(d_model),
            "ffn": init_ffn(k[2], d_model, hidden), "ln3": init_ln(d_model)}


def init_transformer(key, vocab, seq_len, d_model, n_head, hidden, n_layer,
                     pad_idx):
    keys = jax.random.split(key, 2 * n_layer + 3)
    emb_enc = jax.random.normal(keys[0], (vocab, d_model), jnp.float32) * 0.02
    emb_dec = jax.random.normal(keys[1], (vocab, d_model), jnp.float32) * 0.02
    emb_enc = emb_enc.at[pad_idx].set(0.0)   # padding_idx row zeroed
    emb_dec = emb_dec.at[pad_idx].set(0.0)
    return {
        "emb_enc": emb_enc,
        "emb_dec": emb_dec,
        "pe": sinusoidal_pe(seq_len, d_model),
        "enc_layers": [init_encoder_layer(keys[2 + i], d_model, hidden)
                       for i in range(n_layer)],
        "dec_layers": [init_decoder_layer(keys[2 + n_layer + i], d_model, hidden)
                       for i in range(n_layer)],
        "out_proj": init_linear(keys[2 + 2 * n_layer], d_model, vocab),
        "n_head": n_head,
    }


# --------------------------------- main ---------------------------------

if __name__ == "__main__":
    VOCAB, SEQ, D_MODEL, N_HEAD, FFN, N_LAYER, PAD_IDX = 16, 8, 32, 4, 64, 2, 1
    B = 2

    key = jax.random.PRNGKey(0)
    k_par, k_enc, k_dec = jax.random.split(key, 3)

    params = init_transformer(k_par, VOCAB, SEQ, D_MODEL, N_HEAD, FFN,
                              N_LAYER, PAD_IDX)

    x_enc = jax.random.randint(k_enc, (B, SEQ), 0, VOCAB, dtype=jnp.int32)
    x_dec = jax.random.randint(k_dec, (B, SEQ), 0, VOCAB, dtype=jnp.int32)
    # introduce some padding tokens to exercise the padding masks
    x_enc = x_enc.at[:, -2:].set(PAD_IDX)
    x_dec = x_dec.at[:, -1:].set(PAD_IDX)

    out = transformer_forward(params, x_enc, x_dec, PAD_IDX)
    out = jax.block_until_ready(out)

    assert out.shape == (B, SEQ, VOCAB)
    assert bool(jnp.all(jnp.isfinite(out)))
    # rows must sum to 1 after the final softmax
    assert bool(jnp.allclose(jnp.sum(out, axis=-1), 1.0, atol=1e-3))

    print("KERNEL_OK")
</pallas_src>

<mosaic_0001>
module attributes {stable_mosaic.version = 11 : i64} {
  func.func @_linear_kernel(%arg0: i32, %arg1: i32, %arg2: i32, %arg3: memref<16x32xf32, #tpu.memory_space<vmem>>, %arg4: memref<32x96xf32, #tpu.memory_space<vmem>>, %arg5: memref<1x96xf32, #tpu.memory_space<vmem>>, %arg6: memref<16x96xf32, #tpu.memory_space<vmem>>, %arg7: memref<16x96xf32, #tpu.memory_space<vmem>>) attributes {dimension_semantics = [#tpu.dimension_semantics<parallel>, #tpu.dimension_semantics<parallel>, #tpu.dimension_semantics<arbitrary>], iteration_bounds = array<i64: 1, 1, 1>, scalar_prefetch = 0 : i64, scratch_operands = 1 : i64, tpu.core_type = #tpu.core_type<tc>, window_params = [{transform_indices = @transform_0, window_bounds = array<i64: 16, 32>}, {transform_indices = @transform_1, window_bounds = array<i64: 32, 96>}, {transform_indices = @transform_2, window_bounds = array<i64: 1, 96>}, {transform_indices = @transform_3, window_bounds = array<i64: 16, 96>}]} {
    %c0_i32 = arith.constant 0 : i32
    %0 = arith.cmpi eq, %arg2, %c0_i32 : i32
    %1 = arith.extui %0 : i1 to i32
    %c0_i32_0 = arith.constant 0 : i32
    %2 = arith.cmpi ne, %1, %c0_i32_0 : i32
    scf.if %2 {
      %cst_10 = arith.constant 0.000000e+00 : f32
      %14 = vector.broadcast %cst_10 : f32 to vector<16x96xf32>
      %c0_11 = arith.constant 0 : index
      %c0_12 = arith.constant 0 : index
      %15 = vector.load %arg7[%c0_11, %c0_12] : memref<16x96xf32, #tpu.memory_space<vmem>>, vector<16x96xf32>
      tpu.vector_store %arg7[%c0_11, %c0_12], %14 {strides = array<i32>} : memref<16x96xf32, #tpu.memory_space<vmem>>, vector<16x96xf32>,
    } else {
    }
    %c0 = arith.constant 0 : index
    %c0_1 = arith.constant 0 : index
    %3 = vector.load %arg7[%c0, %c0_1] : memref<16x96xf32, #tpu.memory_space<vmem>>, vector<16x96xf32>
    %c0_2 = arith.constant 0 : index
    %c0_3 = arith.constant 0 : index
    %4 = vector.load %arg3[%c0_2, %c0_3] : memref<16x32xf32, #tpu.memory_space<vmem>>, vector<16x32xf32>
    %5 = arith.truncf %4 : vector<16x32xf32> to vector<16x32xbf16>
    %c0_4 = arith.constant 0 : index
    %c0_5 = arith.constant 0 : index
    %6 = vector.load %arg4[%c0_4, %c0_5] : memref<32x96xf32, #tpu.memory_space<vmem>>, vector<32x96xf32>
    %7 = arith.truncf %6 : vector<32x96xf32> to vector<32x96xbf16>
    %cst = arith.constant dense<0.000000e+00> : vector<16x96xf32>
    %8 = tpu.matmul %5, %7, %cst {dimension_numbers = #tpu.dot_dimension_numbers<[1], [0], [0], [1], [0, 0, 1, 1], [], []>} : vector<16x32xbf16>, vector<32x96xbf16>, vector<16x96xf32> -> vector<16x96xf32>
    %9 = arith.addf %3, %8 : vector<16x96xf32>
    %c0_6 = arith.constant 0 : index
    %c0_7 = arith.constant 0 : index
    %10 = vector.load %arg7[%c0_6, %c0_7] : memref<16x96xf32, #tpu.memory_space<vmem>>, vector<16x96xf32>
    tpu.vector_store %arg7[%c0_6, %c0_7], %9 {strides = array<i32>} : memref<16x96xf32, #tpu.memory_space<vmem>>, vector<16x96xf32>,
    %c0_i32_8 = arith.constant 0 : i32
    %11 = arith.cmpi eq, %arg2, %c0_i32_8 : i32
    %12 = arith.extui %11 : i1 to i32
    %c0_i32_9 = arith.constant 0 : i32
    %13 = arith.cmpi ne, %12, %c0_i32_9 : i32
    scf.if %13 {
      %c0_10 = arith.constant 0 : index
      %c0_11 = arith.constant 0 : index
      %14 = vector.load %arg7[%c0_10, %c0_11] : memref<16x96xf32, #tpu.memory_space<vmem>>, vector<16x96xf32>
      %c0_12 = arith.constant 0 : index
      %c0_13 = arith.constant 0 : index
      %15 = vector.load %arg5[%c0_12, %c0_13] : memref<1x96xf32, #tpu.memory_space<vmem>>, vector<1x96xf32>
      %16 = vector.broadcast %15 : vector<1x96xf32> to vector<16x96xf32>
      %17 = arith.addf %14, %16 : vector<16x96xf32>
      %c0_14 = arith.constant 0 : index
      %c0_15 = arith.constant 0 : index
      %18 = vector.load %arg6[%c0_14, %c0_15] : memref<16x96xf32, #tpu.memory_space<vmem>>, vector<16x96xf32>
      tpu.vector_store %arg6[%c0_14, %c0_15], %17 {strides = array<i32>} : memref<16x96xf32, #tpu.memory_space<vmem>>, vector<16x96xf32>,
    } else {
    }
    return
  }
  func.func @transform_0(%arg0: i32, %arg1: i32, %arg2: i32) -> (i32, i32) {
    %c0_i32 = arith.constant 0 : i32
    return %arg0, %arg2 : i32, i32
  }
  func.func @transform_1(%arg0: i32, %arg1: i32, %arg2: i32) -> (i32, i32) {
    %c0_i32 = arith.constant 0 : i32
    return %arg2, %arg1 : i32, i32
  }
  func.func @transform_2(%arg0: i32, %arg1: i32, %arg2: i32) -> (i32, i32) {
    %c0_i32 = arith.constant 0 : i32
    %c0_i32_0 = arith.constant 0 : i32
    return %c0_i32, %arg1 : i32, i32
  }
  func.func @transform_3(%arg0: i32, %arg1: i32, %arg2: i32) -> (i32, i32) {
    %c0_i32 = arith.constant 0 : i32
    return %arg0, %arg1 : i32, i32
  }
}

</mosaic_0001>

<llo_original>
// kernel: tpu_custom_call.1
$region0: #{tpu_custom_call.1}
  #allocation0 [shape = 'u32[]', space=smem, size = 0x4, offset = 0x4, fixed_abs, tag = 'smem constant byte address 0x4 - core index']
  #allocation1 [shape = 'u32[144,128]{1,0:T(1,128)}', space=vmem, size = 0x12000, scoped, tag = 'internal scratch']
  #allocation2 [shape = 'f32[16,96]{1,0:T(8,128)}', space=vmem, size = 0x2000, scoped, tag = 'scratch operand']
  %s0 = inlined_call_operand.hbm [shape: f32[16,32], index: 0, kind: input, shape index: {}]
  %s1 = inlined_call_operand.hbm [shape: f32[32,96], index: 1, kind: input, shape index: {}]
  %s2 = inlined_call_operand.vmem [shape: f32[1,96], index: 2, kind: input, shape index: {}]
  %s3 = inlined_call_operand.hbm [shape: f32[16,96], index: 3, kind: output, shape index: {}]
  %s4 = sld [smem:[#allocation0]]
  $region38: #{tpu_custom_call.1} parent=0
    _
  %s6 = ssub.s32 1, %s4
  %s7 = scalar_select 0, %s6, %s4
  $region1: #{tpu_custom_call.1} parent=0
    #allocation3 [shape = 'u8[8192]{0}', space=vmem, size = 0x2000, scoped, tag = 'input window, operand 0, single buffered']
    #allocation4 [shape = 's32[1]{0}', space=sflag, size = 0x4, scoped, tag = 'scoped memory for tpu_custom_call.1']
    #allocation5 [shape = 's32[1]{0}', space=sflag, size = 0x4, scoped, tag = 'scoped memory for tpu_custom_call.1']
    #allocation6 [shape = 'u8[16384]{0}', space=vmem, size = 0x4000, scoped, tag = 'input window, operand 1, single buffered']
    #allocation7 [shape = 's32[1]{0}', space=sflag, size = 0x4, scoped, tag = 'scoped memory for tpu_custom_call.1']
    #allocation8 [shape = 'u8[8192]{0}', space=vmem, size = 0x2000, scoped, tag = 'output window, operand 0, single buffered']
    %8 = vsyncpa [#allocation4], 0
    %9 = vsyncpa [#allocation7], 0
    %10 = vsyncpa [#allocation5], 0
    // Predicated region
    $region2: #{tpu_custom_call.1} parent=1 // pred_check
      _
    $region3: #{tpu_custom_call.1} parent=1 // pred_check_branch
      %12 = sbr.rel (0) target = $region5
    $region4: #{tpu_custom_call.1} parent=1 // pred_region
      %s14 = ssub.s32 256, 256
      %15 = vsyncadd [#allocation4], %s14
      %s16 = sshll.u32 [#allocation3], 4
      %s17 = int_to_ptr.vmem [resolvable:$true] %s16
      %22 = dma.hbm_to_vmem [thread:$0]  %s0, 256, %s17, [#allocation4], 128, 128, 8
    $region5: #{tpu_custom_call.1} parent=1 // pred_fallthru
      _
    // Predicated region
    $region6: #{tpu_custom_call.1} parent=1 // pred_check
      _
    $region7: #{tpu_custom_call.1} parent=1 // pred_check_branch
      %24 = sbr.rel (0) target = $region9
    $region8: #{tpu_custom_call.1} parent=1 // pred_region
      %s26 = ssub.s32 512, 512
      %27 = vsyncadd [#allocation7], %s26
      %s28 = sshll.u32 [#allocation6], 4
      %s29 = int_to_ptr.vmem [resolvable:$true] %s28
      %34 = dma.hbm_to_vmem [thread:$0]  %s1, 512, %s29, [#allocation7], 128, 128, 8
    $region9: #{tpu_custom_call.1} parent=1 // pred_fallthru
      _
    // Predicated region
    $region10: #{tpu_custom_call.1} parent=1 // pred_check
      _
    $region11: #{tpu_custom_call.1} parent=1 // pred_check_branch
      %36 = sbr.rel (0) target = $region13
    $region12: #{tpu_custom_call.1} parent=1 // pred_region
      _
    $region13: #{tpu_custom_call.1} parent=1 // pred_fallthru
      _
    // Predicated region
    $region14: #{tpu_custom_call.1} parent=1 // pred_check
      _
    $region15: #{tpu_custom_call.1} parent=1 // pred_check_branch
      %38 = sbr.rel (0) target = $region17
    $region16: #{tpu_custom_call.1} parent=1 // pred_region
      %39 = dma.done [#allocation4], 256
    $region17: #{tpu_custom_call.1} parent=1 // pred_fallthru
      _
    // Predicated region
    $region18: #{tpu_custom_call.1} parent=1 // pred_check
      _
    $region19: #{tpu_custom_call.1} parent=1 // pred_check_branch
      %41 = sbr.rel (0) target = $region21
    $region20: #{tpu_custom_call.1} parent=1 // pred_region
      %42 = dma.done [#allocation7], 512
    $region21: #{tpu_custom_call.1} parent=1 // pred_fallthru
      _
    %p44 = scmp.eq.s32.totalorder 0, 0
    // Predicated region
    $region22: #{tpu_custom_call.1} parent=1 // pred_check
      %p45 = pneg %p44
    $region23: #{tpu_custom_call.1} parent=1 // pred_check_branch
      %47 = sbr.rel (%p45) target = $region25
    $region24: #{tpu_custom_call.1} parent=1 // pred_region
      %vm48 = vcmask 785408
      %49 = vst.msk [vmem:[#allocation2] sm:$0xff] %vm48, 0.0
      %50 = vst.msk [vmem:[#allocation2 + $0x8] sm:$0xff] %vm48, 0.0
    $region25: #{tpu_custom_call.1} parent=1 // pred_fallthru
      _
    %v51 = vld [vmem:[#allocation2] sm:$0xff]
    %v52 = vld [vmem:[#allocation2 + $0x8] sm:$0xff]
    %v53 = vld [vmem:[#allocation3] sm:$0xff]
    %v54 = vld [vmem:[#allocation3 + $0x8] sm:$0xff]
    %v55 = vpack.c.bf16 %v54, %v53
    %v56 = vld [vmem:[#allocation6] sm:$0xff]
    %v57 = vld [vmem:[#allocation6 + $0x8] sm:$0xff]
    %v58 = vld [vmem:[#allocation6 + $0x10] sm:$0xff]
    %v59 = vld [vmem:[#allocation6 + $0x18] sm:$0xff]
    %v60 = vpack.c.bf16 %v57, %v56
    %v61 = vpack.c.bf16 %v59, %v58
    %vm62 = vcmask 261120
    %v64 = vsel %vm62, %v55, 0
    %66 = vmatprep.subr.bf16.mxu0 0
    %67 = vmatpush1.bf16.msra.mxu0 %v60
    %68 = vmatprep.subr.bf16.mxu0 0
    %69 = vmatpush1.bf16.msra.mxu0 %v61
    %70 = vmatprep.subr.bf16.mxu0 0
    %71 = vmatpush1.bf16.msra.mxu0 0
    %72 = vmatprep.subr.bf16.mxu0 0
    %73 = vmatpush1.bf16.msra.mxu0 0
    %74 = vmatprep.subr.bf16.mxu0 0
    %75 = vmatpush1.bf16.msra.mxu0 0
    %76 = vmatprep.subr.bf16.mxu0 0
    %77 = vmatpush1.bf16.msra.mxu0 0
    %78 = vmatprep.subr.bf16.mxu0 0
    %79 = vmatpush1.bf16.msra.mxu0 0
    %80 = vmatprep.subr.bf16.mxu0 0
    %81 = vmatpush1.bf16.msra.mxu0 0
    %82 = vmatprep.subr.bf16.mxu0 0
    %83 = vmatpush1.bf16.msra.mxu0 0
    %84 = vmatprep.subr.bf16.mxu0 0
    %85 = vmatpush1.bf16.msra.mxu0 0
    %86 = vmatprep.subr.bf16.mxu0 0
    %87 = vmatpush1.bf16.msra.mxu0 0
    %88 = vmatprep.subr.bf16.mxu0 0
    %89 = vmatpush1.bf16.msra.mxu0 0
    %90 = vmatprep.subr.bf16.mxu0 0
    %91 = vmatpush1.bf16.msra.mxu0 0
    %92 = vmatprep.subr.bf16.mxu0 0
    %93 = vmatpush1.bf16.msra.mxu0 0
    %94 = vmatprep.subr.bf16.mxu0 0
    %95 = vmatpush1.bf16.msra.mxu0 0
    %96 = vmatprep.subr.bf16.mxu0 0
    %97 = vmatpush1.bf16.msra.mxu0 0
    %98 = vmatprep.mubr.bf16.mxu0 0
    %99 = vmatmul.mubr.bf16.gmra.mrb[0].mxu0 %v64
    %v100 = vpop.f32.mrb[0].mxu0
    %v101 = vadd.f32 0.0, %v100
    %v102 = vpop.f32.mrb[0].mxu0
    %v103 = vpop.f32.mrb[0].mxu0
    %v104 = vadd.f32 0.0, %v103
    %v105 = vpop.f32.mrb[0].mxu0
    %106 = vdwg.mxu0
    %v107 = vadd.f32 %v51, %v101
    %v108 = vadd.f32 %v52, %v104
    %vm109 = vcmask 785408
    %110 = vst.msk [vmem:[#allocation2] sm:$0xff] %vm109, %v107
    %111 = vst.msk [vmem:[#allocation2 + $0x8] sm:$0xff] %vm109, %v108
    // Predicated region
    $region26: #{tpu_custom_call.1} parent=1 // pred_check
      %p112 = pneg %p44
    $region27: #{tpu_custom_call.1} parent=1 // pred_check_branch
      %114 = sbr.rel (%p112) target = $region29
    $region28: #{tpu_custom_call.1} parent=1 // pred_region
      %v115 = vld [vmem:[#allocation2] sm:$0xff]
      %v116 = vld [vmem:[#allocation2 + $0x8] sm:$0xff]
      %v117 = vld [vmem:[%s2] sm:$0x1]
      %v119 = vlaneseq
      %v120 = vshrl.u32 %v119, 7
      %v121 = vsub.s32 0, %v120
      %v122 = vrot.slane %v117, %v121
      %v124 = vadd.f32 %v115, %v122
      %v125 = vadd.f32 %v116, %v122
      %126 = vst.msk [vmem:[#allocation8] sm:$0xff] %vm109, %v124
      %127 = vst.msk [vmem:[#allocation8 + $0x8] sm:$0xff] %vm109, %v125
    $region29: #{tpu_custom_call.1} parent=1 // pred_fallthru
      _
    // Predicated region
    $region30: #{tpu_custom_call.1} parent=1 // pred_check
      _
    $region31: #{tpu_custom_call.1} parent=1 // pred_check_branch
      %129 = sbr.rel (0) target = $region33
    $region32: #{tpu_custom_call.1} parent=1 // pred_region
      %s131 = ssub.s32 256, 256
      %132 = vsyncadd [#allocation5], %s131
      %s133 = sshll.u32 [#allocation8], 4
      %s134 = int_to_ptr.vmem [resolvable:$true] %s133
      %139 = dma.vmem_to_hbm [thread:$0]  %s134, 256, %s3, [#allocation5], 128, 128, 8
    $region33: #{tpu_custom_call.1} parent=1 // pred_fallthru
      _
    // Predicated region
    $region34: #{tpu_custom_call.1} parent=1 // pred_check
      _
    $region35: #{tpu_custom_call.1} parent=1 // pred_check_branch
      %141 = sbr.rel (0) target = $region37
    $region36: #{tpu_custom_call.1} parent=1 // pred_region
      %142 = dma.done [#allocation5], 256
    $region37: #{tpu_custom_call.1} parent=1 // pred_fallthru
      _
    %143 = vsyncpa [#allocation4], 1
    %144 = vsyncpa [#allocation7], 1
    %145 = vsyncpa [#allocation5], 1

</llo_original>
